<compile_context>
chip_gen: v7x
topology: tpu7x:2x2x1
jax: 0.10.0
libtpu: 0.0.40
codegen_flags: <defaults>
</compile_context>

<pallas_src>
import jax
import jax.numpy as jnp
from jax import lax
from jax.experimental import pallas as pl
from jax.experimental.pallas import tpu as pltpu

EPS = 1e-7


def _round_up(x, m):
    return (x + m - 1) // m * m


def _vmem_budget_bytes():
    """Scoped-VMEM budget: ~3/4 of physical, capped at 64 MiB."""
    cap = 64 * 1024 * 1024
    try:
        cap = int(pltpu.get_tpu_info().vmem_capacity_bytes)
    except Exception:
        pass
    return max(16 * 1024 * 1024, min(3 * cap // 4, 64 * 1024 * 1024))


_VMEM_LIMIT = _vmem_budget_bytes()
# ~8 MiB per pipelined buffer: 4 buffers (in+out, double-buffered) fit every
# generation's budget while amortizing the ~0.35us fixed per-step cost.
_TARGET_TILE = max(1 << 20, min(8 << 20, _VMEM_LIMIT // 6))


def _sublane(itemsize):
    # rows packed per (8,128) VMEM tile: 8 for f32, 16 for bf16, 32 for int8
    return max(8, 32 // itemsize)


# ----------------------------------------------------------------------------
# Kernels
# ----------------------------------------------------------------------------
def _normalize_chw_kernel(x_ref, o_ref):
    # x_ref/o_ref: (tb, C, thw). Channel reduction over sublanes (XLU);
    # HW on lanes so loads/stores stay lane-dense even for tiny C.
    x32 = x_ref[...].astype(jnp.float32)
    sumsq = jnp.sum(x32 * x32, axis=1, keepdims=True)
    inv = pl.reciprocal(jnp.sqrt(sumsq) + EPS, approx=True)   # EUP slot
    # Re-read instead of keeping the f32 upcast live across the reduction.
    o_ref[...] = (x_ref[...].astype(jnp.float32) * inv).astype(o_ref.dtype)


def _normalize_rows_kernel(x_ref, o_ref):
    # x_ref/o_ref: (tm, C); reduce over the lane axis.
    x32 = x_ref[...].astype(jnp.float32)
    sumsq = jnp.sum(x32 * x32, axis=-1, keepdims=True)
    inv = pl.reciprocal(jnp.sqrt(sumsq) + EPS, approx=True)
    o_ref[...] = (x_ref[...].astype(jnp.float32) * inv).astype(o_ref.dtype)


def _make_grouped_rows_kernel(c):
    """(tm, 128) tiles holding 128//c packed rows of width c each.

    Per-group sums (broadcast back over each group's lanes) are computed with
    one MXU matmul against a block-diagonal ones matrix, so the whole kernel
    stays lane-dense: no in-kernel reshapes, no masked partial stores.
    """
    def kernel(x_ref, o_ref):
        x32 = x_ref[...].astype(jnp.float32)
        gi = lax.broadcasted_iota(jnp.int32, (128, 128), 0) // c
        gj = lax.broadcasted_iota(jnp.int32, (128, 128), 1) // c
        ones_blk = (gi == gj).astype(jnp.float32)
        sumsq = jnp.dot(x32 * x32, ones_blk,
                        preferred_element_type=jnp.float32,
                        precision=lax.Precision.HIGHEST)
        inv = pl.reciprocal(jnp.sqrt(sumsq) + EPS, approx=True)
        o_ref[...] = (x_ref[...].astype(jnp.float32) * inv).astype(o_ref.dtype)
    return kernel


# ----------------------------------------------------------------------------
# 4-D path: x is (B, C, HW); reduce over C (sublanes), HW on lanes.
# ----------------------------------------------------------------------------
def _normalize_bc_hw(x3, target_tile_bytes=None):
    target = target_tile_bytes or _TARGET_TILE
    B, C, HW = x3.shape
    itemsize = x3.dtype.itemsize
    c_sub = _round_up(C, _sublane(itemsize))       # sublane-padded channel rows
    lane_bytes = c_sub * 128 * itemsize            # VMEM bytes per 128 HW lanes
    hw_chunks = pl.cdiv(HW, 128)
    max_chunks = max(1, target // lane_bytes)

    if max_chunks >= hw_chunks:
        # Whole HW row fits in one block: block over the batch axis instead,
        # so small feature maps are not per-step-overhead bound.
        thw, grid_hw = HW, 1
        per_b = lane_bytes * hw_chunks
        tb_max = min(B, max(1, target // per_b))
        if B >= 2:                                 # keep >= 2 steps for 2 TCs
            tb_max = min(tb_max, max(1, B // 2))
        tb = max(d for d in range(1, tb_max + 1) if B % d == 0)  # exact split
        grid_b = B // tb
    else:
        # Tile along HW (lane axis); ragged tail handled by masked edge writes
        # (no host-side pad/slice passes). Reduction over C never crosses it.
        thw = max_chunks * 128
        tb, grid_b = 1, B
        grid_hw = pl.cdiv(HW, thw)

    return pl.pallas_call(
        _normalize_chw_kernel,
        out_shape=jax.ShapeDtypeStruct((B, C, HW), x3.dtype),
        grid_spec=pltpu.PrefetchScalarGridSpec(
            num_scalar_prefetch=0,
            grid=(grid_b, grid_hw),
            in_specs=[pl.BlockSpec((tb, C, thw), lambda b, s: (b, 0, s))],
            out_specs=pl.BlockSpec((tb, C, thw), lambda b, s: (b, 0, s)),
        ),
        compiler_params=pltpu.CompilerParams(
            dimension_semantics=("parallel", "parallel"),
            vmem_limit_bytes=_VMEM_LIMIT),
    )(x3)


# ----------------------------------------------------------------------------
# 2-D path: x is (M, C); reduce over C.
# ----------------------------------------------------------------------------
def _normalize_2d(x2, target_tile_bytes=None):
    target = target_tile_bytes or _TARGET_TILE
    M, C = x2.shape
    itemsize = x2.dtype.itemsize
    sub = _sublane(itemsize)

    if 0 < C < 128 and 128 % C == 0 and M % (128 // C) == 0:
        # Lane-densify: pack 128//C rows per 128-lane row (free reshape).
        g = 128 // C
        rows, width = M // g, 128
        xr = x2.reshape(rows, width)
        kernel = _make_grouped_rows_kernel(C)
    else:
        rows, width = M, C
        xr = x2
        kernel = _normalize_rows_kernel

    lane_w = _round_up(width, 128)                 # lanes occupied regardless of C
    tm = max(sub, (target // (lane_w * itemsize)) // sub * sub)
    if tm >= rows:
        tm = rows                                  # full extent block (any size)
    grid_m = pl.cdiv(rows, tm)
    if grid_m == 1 and rows >= 2 * sub:            # keep >= 2 steps for 2 TCs
        tm = _round_up(pl.cdiv(rows, 2), sub)
        grid_m = pl.cdiv(rows, tm)

    out = pl.pallas_call(
        kernel,
        out_shape=jax.ShapeDtypeStruct((rows, width), x2.dtype),
        grid_spec=pltpu.PrefetchScalarGridSpec(
            num_scalar_prefetch=0,
            grid=(grid_m,),
            in_specs=[pl.BlockSpec((tm, width), lambda i: (i, 0))],
            out_specs=pl.BlockSpec((tm, width), lambda i: (i, 0)),
        ),
        compiler_params=pltpu.CompilerParams(
            dimension_semantics=("parallel",),
            vmem_limit_bytes=_VMEM_LIMIT),
    )(xr)

    return out.reshape(M, C) if (rows, width) != (M, C) else out


# ----------------------------------------------------------------------------
# Public wrapper matching the PyTorch Normalize module (power=2).
# ----------------------------------------------------------------------------
def normalize(x):
    """out = x / (||x||_2 over dim 1 + 1e-7). Accepts (M, C) or (B, C, *spatial)."""
    if x.ndim == 2:
        return _normalize_2d(x)
    assert x.ndim >= 3, "expected (M, C) or (B, C, spatial...)"
    B, C = x.shape[0], x.shape[1]
    hw = 1
    for d in x.shape[2:]:
        hw *= d
    out3 = _normalize_bc_hw(x.reshape(B, C, hw))   # contiguous reshape, no transpose
    return out3.reshape(x.shape)


def _normalize_ref(x, power=2):
    norm = jnp.power(jnp.sum(jnp.power(x, power), axis=1, keepdims=True),
                     1.0 / power)
    return x / (norm + EPS)


if __name__ == "__main__":
    key = jax.random.PRNGKey(0)
    k1, k2, k3, k4, k5 = jax.random.split(key, 5)

    def check(out, x, name, atol=2e-3, rtol=2e-3):
        ref = _normalize_ref(x)
        assert out.shape == x.shape and out.dtype == x.dtype, name
        assert jnp.allclose(out, ref, atol=atol, rtol=rtol), f"mismatch: {name}"

    # 1) Canonical NCHW feature map (batch-blocked, whole-HW blocks).
    x = jax.random.normal(k1, (2, 4, 16, 16), dtype=jnp.float32)
    check(jax.block_until_ready(normalize(x)), x, "4d_small")

    # 2) Ragged NCHW (H*W not a multiple of 128; masked edge stores, no pad).
    xr = jax.random.normal(k2, (2, 3, 5, 7), dtype=jnp.float32)
    check(jax.block_until_ready(normalize(xr)), xr, "4d_ragged")

    # 3) HW-tiled branch with a partial tail block (tiny tile target forces it).
    xt = jax.random.normal(k3, (1, 8, 48, 100), dtype=jnp.float32)
    out3 = _normalize_bc_hw(xt.reshape(1, 8, 48 * 100), target_tile_bytes=64 * 1024)
    check(jax.block_until_ready(out3).reshape(xt.shape), xt, "4d_tiled_ragged")

    # 4) (M, C) with lane densification (C=32 -> 4 rows packed per 128 lanes).
    x2 = jax.random.normal(k4, (64, 32), dtype=jnp.float32)
    check(jax.block_until_ready(normalize(x2)), x2, "2d_dense")

    # 5) Ragged (M, C) falling back to the plain row kernel with a partial tail.
    x2r = jax.random.normal(k5, (37, 32), dtype=jnp.float32)
    check(jax.block_until_ready(normalize(x2r)), x2r, "2d_ragged")

    print("KERNEL_OK")
</pallas_src>

<mosaic_0001>
module attributes {stable_mosaic.version = 11 : i64} {
  func.func @_normalize_chw_kernel(%arg0: i32, %arg1: i32, %arg2: memref<1x4x256xf32, #tpu.memory_space<vmem>>, %arg3: memref<1x4x256xf32, #tpu.memory_space<vmem>>) attributes {dimension_semantics = [#tpu.dimension_semantics<parallel>, #tpu.dimension_semantics<parallel>], iteration_bounds = array<i64: 2, 1>, scalar_prefetch = 0 : i64, scratch_operands = 0 : i64, tpu.core_type = #tpu.core_type<tc>, window_params = [{transform_indices = @transform_0, window_bounds = array<i64: 1, 4, 256>}, {transform_indices = @transform_1, window_bounds = array<i64: 1, 4, 256>}]} {
    %c0 = arith.constant 0 : index
    %c0_0 = arith.constant 0 : index
    %c0_1 = arith.constant 0 : index
    %0 = vector.load %arg2[%c0, %c0_0, %c0_1] : memref<1x4x256xf32, #tpu.memory_space<vmem>>, vector<1x4x256xf32>
    %1 = arith.mulf %0, %0 : vector<1x4x256xf32>
    %cst = arith.constant dense<0.000000e+00> : vector<1x256xf32>
    %2 = vector.multi_reduction <add>, %1, %cst [1] : vector<1x4x256xf32> to vector<1x256xf32>
    %3 = vector.shape_cast %2 : vector<1x256xf32> to vector<1x1x256xf32>
    %4 = math.sqrt %3 : vector<1x1x256xf32>
    %cst_2 = arith.constant 1.000000e-07 : f32
    %5 = vector.broadcast %cst_2 : f32 to vector<1x1x256xf32>
    %6 = arith.addf %4, %5 : vector<1x1x256xf32>
    %7 = tpu.reciprocal %6 {approx = true} : vector<1x1x256xf32> -> vector<1x1x256xf32>
    %c0_3 = arith.constant 0 : index
    %c0_4 = arith.constant 0 : index
    %c0_5 = arith.constant 0 : index
    %8 = vector.load %arg2[%c0_3, %c0_4, %c0_5] : memref<1x4x256xf32, #tpu.memory_space<vmem>>, vector<1x4x256xf32>
    %9 = vector.broadcast %7 : vector<1x1x256xf32> to vector<1x4x256xf32>
    %10 = arith.mulf %8, %9 : vector<1x4x256xf32>
    %c0_6 = arith.constant 0 : index
    %c0_7 = arith.constant 0 : index
    %c0_8 = arith.constant 0 : index
    %11 = vector.load %arg3[%c0_6, %c0_7, %c0_8] : memref<1x4x256xf32, #tpu.memory_space<vmem>>, vector<1x4x256xf32>
    tpu.vector_store %arg3[%c0_6, %c0_7, %c0_8], %10 {strides = array<i32>} : memref<1x4x256xf32, #tpu.memory_space<vmem>>, vector<1x4x256xf32>,
    return
  }
  func.func @transform_0(%arg0: i32, %arg1: i32) -> (i32, i32, i32) {
    %c0_i32 = arith.constant 0 : i32
    %c0_i32_0 = arith.constant 0 : i32
    return %arg0, %c0_i32, %arg1 : i32, i32, i32
  }
  func.func @transform_1(%arg0: i32, %arg1: i32) -> (i32, i32, i32) {
    %c0_i32 = arith.constant 0 : i32
    %c0_i32_0 = arith.constant 0 : i32
    return %arg0, %c0_i32, %arg1 : i32, i32, i32
  }
}

</mosaic_0001>

<llo_original>
// kernel: tpu_custom_call.1
$region0: #{tpu_custom_call.1}
  #allocation0 [shape = 'u32[]', space=smem, size = 0x4, offset = 0x4, fixed_abs, tag = 'smem constant byte address 0x4 - core index']
  #allocation1 [shape = 'u32[144,128]{1,0:T(1,128)}', space=vmem, size = 0x12000, scoped, tag = 'internal scratch']
  %s0 = inlined_call_operand.hbm [shape: f32[2,4,256], index: 0, kind: input, shape index: {}]
  %s1 = inlined_call_operand.hbm [shape: f32[2,4,256], index: 1, kind: output, shape index: {}]
  %s2 = sld [smem:[#allocation0]]
  $region41: #{tpu_custom_call.1} parent=0
    _
  %s4 = ssub.s32 1, %s2
  %s5 = scalar_select 0, %s4, %s2
  $region1: #{tpu_custom_call.1} parent=0
    #allocation2 [shape = 'u8[8192]{0}', space=vmem, size = 0x2000, scoped, tag = 'input window, operand 0']
    #allocation3 [shape = 's32[2]{0}', space=sflag, size = 0x8, scoped, tag = 'scoped memory for tpu_custom_call.1']
    #allocation4 [shape = 's32[2]{0}', space=sflag, size = 0x8, scoped, tag = 'scoped memory for tpu_custom_call.1']
    #allocation5 [shape = 'u8[8192]{0}', space=vmem, size = 0x2000, scoped, tag = 'output window, operand 0']
    %6 = vsyncpa [#allocation3], 0
    %s7 = scalar_lea.sflag [#allocation3], 1
    %8 = vsyncpa %s7, 0
    %9 = vsyncpa [#allocation4], 0
    %s10 = scalar_lea.sflag [#allocation4], 1
    %11 = vsyncpa %s10, 0
    loop: start=0, step=1, limit=4
    $region2: #{tpu_custom_call.1} parent=1 // loop_pre_header
      _
    $region3: #{tpu_custom_call.1} parent=1 // loop_header
      %s13 = sphi 0, %s17
      %p14 = scmp.ge.s32.totalorder %s13, 4
      %s20 = sphi 0, %s32
      %s21 = sphi 0, %s28
      %s22 = sphi 0, %s20
      %s23 = sphi 0, %s21
      %s24 = sphi 0, %s22
      %s25 = sphi 0, %s23
      %s37 = sphi 0, %s39
      %s40 = sphi 0, %s37
      %s41 = sphi 0, %s40
      %s57 = sphi 0, %s41
      %s65 = sphi 0, %s67
      %s68 = sphi 0, %s65
      %s69 = sphi 0, %s68
      %s85 = sphi 0, %s69
    $region4: #{tpu_custom_call.1} parent=1 // loop_header_branch
      %16 = sbr.rel (%p14) target = $region8
    $region5: #{tpu_custom_call.1} parent=1 // loop_body
      %s18 = ssub.s32 %s13, 1
      %s19 = ssub.s32 %s13, 2
      %s26 = sadd.s32 1, %s21
      %p27 = scmp.ge.s32.totalorder %s26, 1
      %s28 = scalar_select %p27, 0, %s26
      %s29 = sadd.s32 1, %s20
      %s30 = scalar_select %p27, %s29, %s20
      %p31 = scmp.ge.s32.totalorder %s30, 2
      %s32 = scalar_select %p31, 0, %s30
      %s33 = ssub.s32 %s20, %s32
      %s34 = ssub.s32 %s21, %s28
      %s35 = sor.u32 %s33, %s34
      %p36 = scmp.eq.s32.totalorder %s35, 0
      %s38 = sadd.s32 %s37, 1
      %s39 = scalar_select %p36, %s37, %s38
      %p42 = pneg %p36
      %p43 = scmp.eq.s32.totalorder %s13, 1
      %p44 = por %p42, %p43
      %p45 = scmp.ne.s32.totalorder %s37, %s40
      %p46 = scmp.eq.s32.totalorder %s13, 0
      %p47 = por %p45, %p46
      %p48 = scmp.ne.s32.totalorder %s37, %s40
      %p49 = scmp.eq.s32.totalorder %s18, 1
      %p50 = por %p48, %p49
      %p51 = scmp.ne.s32.totalorder %s40, %s41
      %p52 = scmp.eq.s32.totalorder %s18, 0
      %p53 = por %p51, %p52
      %p54 = scmp.ne.s32.totalorder %s40, %s41
      %p55 = scmp.eq.s32.totalorder %s19, 1
      %p56 = por %p54, %p55
      %p58 = scmp.ne.s32.totalorder %s41, %s57
      %p59 = scmp.eq.s32.totalorder %s19, 0
      %p60 = por %p58, %p59
      %s61 = ssub.s32 %s20, %s32
      %s62 = ssub.s32 %s21, %s28
      %s63 = sor.u32 %s61, %s62
      %p64 = scmp.eq.s32.totalorder %s63, 0
      %s66 = sadd.s32 %s65, 1
      %s67 = scalar_select %p64, %s65, %s66
      %p70 = pneg %p64
      %p71 = scmp.eq.s32.totalorder %s13, 1
      %p72 = por %p70, %p71
      %p73 = scmp.ne.s32.totalorder %s65, %s68
      %p74 = scmp.eq.s32.totalorder %s13, 0
      %p75 = por %p73, %p74
      %p76 = scmp.ne.s32.totalorder %s65, %s68
      %p77 = scmp.eq.s32.totalorder %s18, 1
      %p78 = por %p76, %p77
      %p79 = scmp.ne.s32.totalorder %s68, %s69
      %p80 = scmp.eq.s32.totalorder %s18, 0
      %p81 = por %p79, %p80
      %p82 = scmp.ne.s32.totalorder %s68, %s69
      %p83 = scmp.eq.s32.totalorder %s19, 1
      %p84 = por %p82, %p83
      %p86 = scmp.ne.s32.totalorder %s69, %s85
      %p87 = scmp.eq.s32.totalorder %s19, 0
      %p88 = por %p86, %p87
      %p89 = scmp.le.s32.totalorder 1, %s13
      %p90 = scmp.lt.s32.totalorder %s13, 3
      %p91 = pnand %p89, %p90
      %p92 = pneg %p91
      // Predicated region
      $region9: #{tpu_custom_call.1} parent=5 // pred_check
        _
      $region10: #{tpu_custom_call.1} parent=5 // pred_check_branch
        %94 = sbr.rel (%p91) target = $region12
      $region11: #{tpu_custom_call.1} parent=5 // pred_region
        %s95 = ssub.s32 %s13, 1
      $region12: #{tpu_custom_call.1} parent=5 // pred_fallthru
        _
      %p96 = scmp.lt.s32.totalorder %s13, 2
      // Predicated region
      $region13: #{tpu_custom_call.1} parent=5 // pred_check
        %p97 = pneg %p96
      $region14: #{tpu_custom_call.1} parent=5 // pred_check_branch
        %99 = sbr.rel (%p97) target = $region16
      $region15: #{tpu_custom_call.1} parent=5 // pred_region
        // Predicated region
        $region17: #{tpu_custom_call.1} parent=15 // pred_check
          %p100 = pneg %p47
        $region18: #{tpu_custom_call.1} parent=15 // pred_check_branch
          %102 = sbr.rel (%p100) target = $region20
        $region19: #{tpu_custom_call.1} parent=15 // pred_region
          %s103 = sand.u32 %s37, 1
          %s104 = scalar_lea.sflag [#allocation3], %s103
          %s105 = sand.u32 %s37, 1
          %s106 = smul.addr %s105, 8
          %s107 = scalar_lea.vmem [#allocation2], %s106
          %s108 = smul.u32 2, %s21
          %s110 = ssub.s32 128, 128
          %111 = vsyncadd %s104, %s110
          %s112 = smul.addr %s20, 2
          %s113 = sadd.s32 %s108, %s112
          %s114 = smul.addr %s113, 64
          %s115 = scalar_lea.hbm %s0, %s114
          %s117 = sshll.u32 %s107, 4
          %s118 = int_to_ptr.vmem [resolvable:$true] %s117
          %120 = dma.hbm_to_vmem [thread:$0]  %s115, 128, %s118, %s104
        $region20: #{tpu_custom_call.1} parent=15 // pred_fallthru
          _
      $region16: #{tpu_custom_call.1} parent=5 // pred_fallthru
        _
      %p121 = scmp.le.s32.totalorder 1, %s13
      %p122 = scmp.lt.s32.totalorder %s13, 3
      %p123 = pnand %p121, %p122
      %p124 = pneg %p123
      // Predicated region
      $region21: #{tpu_custom_call.1} parent=5 // pred_check
        _
      $region22: #{tpu_custom_call.1} parent=5 // pred_check_branch
        %126 = sbr.rel (%p123) target = $region24
      $region23: #{tpu_custom_call.1} parent=5 // pred_region
        %s127 = ssub.s32 %s13, 1
        %s128 = sand.u32 %s40, 1
        %s129 = scalar_lea.sflag [#allocation3], %s128
        %s130 = sand.u32 %s40, 1
        %s131 = smul.addr %s130, 8
        %s132 = scalar_lea.vmem [#allocation2], %s131
        // Predicated region
        $region25: #{tpu_custom_call.1} parent=23 // pred_check
          %p133 = pneg %p53
        $region26: #{tpu_custom_call.1} parent=23 // pred_check_branch
          %135 = sbr.rel (%p133) target = $region28
        $region27: #{tpu_custom_call.1} parent=23 // pred_region
          %136 = dma.done %s129, 128
        $region28: #{tpu_custom_call.1} parent=23 // pred_fallthru
          _
        %s137 = sand.u32 %s40, 1
        %s138 = scalar_lea.sflag [#allocation3], %s137
        %s139 = sand.u32 %s40, 1
        %s140 = smul.addr %s139, 8
        %s141 = scalar_lea.vmem [#allocation2], %s140
        %p142 = pneg %p53
        %p143 = pneg %p50
        %p144 = pneg %p81
        %p145 = pneg %p78
        %s146 = sand.u32 %s68, 1
        %s147 = scalar_lea.sflag [#allocation4], %s146
        %s148 = sand.u32 %s68, 1
        %s149 = smul.addr %s148, 8
        %s150 = scalar_lea.vmem [#allocation5], %s149
        %s151 = smul.u32 2, %s23
        %s152 = smul.u32 2, %s23
        %v153 = vld [vmem:[%s132] sm:$0xff]
        %v154 = vmul.f32 %v153, %v153
        %v156 = vcombine.high %v154, %v154
        %vm158 = vcmask 1043456
        %v159 = vsel %vm158, %v154, 0.0
        %v160 = vrot.slane %v159, 4
        %v161 = vadd.f32 %v159, %v160
        %v162 = vrot.slane %v161, 2
        %v163 = vadd.f32 %v161, %v162
        %v164 = vrot.slane %v163, 1
        %v165 = vadd.f32 %v163, %v164
        %v166 = vsel %vm158, %v156, 0.0
        %v167 = vrot.slane %v166, 4
        %v168 = vadd.f32 %v166, %v167
        %v169 = vrot.slane %v168, 2
        %v170 = vadd.f32 %v168, %v169
        %v171 = vrot.slane %v170, 1
        %v172 = vadd.f32 %v170, %v171
        %v173 = vrsqrt.pop %v165
        %v174 = vmul.f32 %v165, %v173
        %vm175 = vcmp.eq.f32.partialorder %v165, inf
        %v176 = vsel %vm175, %v165, %v174
        %vm177 = vcmp.eq.f32.partialorder %v165, 0.0
        %v178 = vand.u32 %v165, 2147483648
        %v179 = vsel %vm177, %v178, %v176
        %v180 = vrsqrt.pop %v172
        %v181 = vmul.f32 %v172, %v180
        %vm182 = vcmp.eq.f32.partialorder %v172, inf
        %v183 = vsel %vm182, %v172, %v181
        %vm184 = vcmp.eq.f32.partialorder %v172, 0.0
        %v185 = vand.u32 %v172, 2147483648
        %v186 = vsel %vm184, %v185, %v183
        %v187 = vadd.f32 %v179, 1e-07
        %v188 = vadd.f32 %v186, 1e-07
        %v189 = vrcp.pop %v187
        %v190 = vrcp.pop %v188
        %v193 = vcombine.low %v189, %v190
        %v195 = vmul.f32 %v153, %v193
        %196 = vst [vmem:[%s150] sm:$0xff] %v195
        %s197 = sand.u32 %s68, 1
        %s198 = scalar_lea.sflag [#allocation4], %s197
        %s199 = sand.u32 %s68, 1
        %s200 = smul.addr %s199, 8
        %s201 = scalar_lea.vmem [#allocation5], %s200
        // Predicated region
        $region29: #{tpu_custom_call.1} parent=23 // pred_check
          %p202 = pneg %p78
        $region30: #{tpu_custom_call.1} parent=23 // pred_check_branch
          %204 = sbr.rel (%p202) target = $region32
        $region31: #{tpu_custom_call.1} parent=23 // pred_region
          %s205 = smul.u32 2, %s23
          %s207 = ssub.s32 128, 128
          %208 = vsyncadd %s198, %s207
          %s209 = smul.addr %s22, 2
          %s210 = sadd.s32 %s205, %s209
          %s211 = smul.addr %s210, 64
          %s212 = scalar_lea.hbm %s1, %s211
          %s214 = sshll.u32 %s201, 4
          %s215 = int_to_ptr.vmem [resolvable:$true] %s214
          %217 = dma.vmem_to_hbm [thread:$0]  %s215, 128, %s212, %s198
        $region32: #{tpu_custom_call.1} parent=23 // pred_fallthru
          _
      $region24: #{tpu_custom_call.1} parent=5 // pred_fallthru
        _
      %p218 = scmp.le.s32.totalorder 2, %s13
      // Predicated region
      $region33: #{tpu_custom_call.1} parent=5 // pred_check
        %p219 = pneg %p218
      $region34: #{tpu_custom_call.1} parent=5 // pred_check_branch
        %221 = sbr.rel (%p219) target = $region36
      $region35: #{tpu_custom_call.1} parent=5 // pred_region
        %s222 = ssub.s32 %s13, 2
        // Predicated region
        $region37: #{tpu_custom_call.1} parent=35 // pred_check
          %p223 = pneg %p84
        $region38: #{tpu_custom_call.1} parent=35 // pred_check_branch
          %225 = sbr.rel (%p223) target = $region40
        $region39: #{tpu_custom_call.1} parent=35 // pred_region
          %s226 = sand.u32 %s69, 1
          %s227 = scalar_lea.sflag [#allocation4], %s226
          %s228 = sand.u32 %s69, 1
          %s229 = smul.addr %s228, 8
          %s230 = scalar_lea.vmem [#allocation5], %s229
          %231 = dma.done %s227, 128
        $region40: #{tpu_custom_call.1} parent=35 // pred_fallthru
          _
      $region36: #{tpu_custom_call.1} parent=5 // pred_fallthru
        _
    $region6: #{tpu_custom_call.1} parent=1 // loop_footer
      %s17 = sadd.s32 1, %s13
    $region7: #{tpu_custom_call.1} parent=1 // loop_footer_branch
      %12 = sbr.rel target = $region3
    $region8: #{tpu_custom_call.1} parent=1 // loop_exit
      _
    %232 = vsyncpa [#allocation3], 1
    %s233 = scalar_lea.sflag [#allocation3], 1
    %234 = vsyncpa %s233, 1
    %235 = vsyncpa [#allocation4], 1
    %s236 = scalar_lea.sflag [#allocation4], 1
    %237 = vsyncpa %s236, 1

</llo_original>
